<compile_context>
chip_gen: v7x
topology: tpu7x:2x2x1
jax: 0.10.0
libtpu: 0.0.40
codegen_flags: <defaults>
</compile_context>

<pallas_src>
import jax
import jax.numpy as jnp
from jax.experimental import pallas as pl
from jax.experimental.pallas import tpu as pltpu


def decoder_mlp_kernel(x_ref,
                       w1_ref, b1_ref,
                       w2_ref, b2_ref,
                       w3_ref, b3_ref,
                       w4_ref, b4_ref,
                       o_ref):
    """Fused 4-layer MLP on one row-tile of x: (Linear->ReLU) x3, then Linear."""
    x = x_ref[...]                                   # bf16 row tile

    h = jnp.dot(x, w1_ref[...], preferred_element_type=jnp.float32) + b1_ref[...]
    h = jnp.maximum(h, 0.0)                          # f32 elementwise

    h = jnp.dot(h.astype(w2_ref.dtype), w2_ref[...],
                preferred_element_type=jnp.float32) + b2_ref[...]
    h = jnp.maximum(h, 0.0)

    h = jnp.dot(h.astype(w3_ref.dtype), w3_ref[...],
                preferred_element_type=jnp.float32) + b3_ref[...]
    h = jnp.maximum(h, 0.0)

    h = jnp.dot(h.astype(w4_ref.dtype), w4_ref[...],
                preferred_element_type=jnp.float32) + b4_ref[...]

    o_ref[...] = h.astype(o_ref.dtype)


def decoder_forward(x, params, *, target_tile_rows=1024):
    """x: [N, latent_dim] node features. Returns [N, output_dim] in x.dtype."""
    (w1, b1), (w2, b2), (w3, b3), (w4, b4) = params
    N, d_in = x.shape
    d_hid = w1.shape[1]
    d_out = w4.shape[1]

    # --- tiling: big row tiles; grid length >= 2 and even for v7x megacore.
    grid_len = max(2, pl.cdiv(N, target_tile_rows))
    if grid_len % 2:
        grid_len += 1
    tile_rows = pl.cdiv(N, grid_len)
    tile_rows = ((tile_rows + 15) // 16) * 16        # sublane-align (bf16 packs 16)
    n_pad = grid_len * tile_rows

    # --- bf16 inputs/weights (f32 accumulation kept inside the kernel).
    x_in = x.astype(jnp.bfloat16)
    if n_pad != N:
        x_in = jnp.pad(x_in, ((0, n_pad - N), (0, 0)))
    w1c, w2c, w3c, w4c = (w.astype(jnp.bfloat16) for w in (w1, w2, w3, w4))
    b1c, b2c, b3c, b4c = (b.astype(jnp.float32) for b in (b1, b2, b3, b4))

    # Weights / biases: whole-array blocks, constant index_map -> fetched once,
    # resident in VMEM for the whole grid.
    full = lambda shape: pl.BlockSpec(shape, lambda i: (0, 0))

    out = pl.pallas_call(
        decoder_mlp_kernel,
        out_shape=jax.ShapeDtypeStruct((n_pad, d_out), x.dtype),
        grid_spec=pltpu.PrefetchScalarGridSpec(
            num_scalar_prefetch=0,
            grid=(grid_len,),
            in_specs=[
                pl.BlockSpec((tile_rows, d_in), lambda i: (i, 0)),   # x row tile
                full((d_in, d_hid)), full((1, d_hid)),               # layer 1
                full((d_hid, d_hid)), full((1, d_hid)),              # layer 2
                full((d_hid, d_hid)), full((1, d_hid)),              # layer 3
                full((d_hid, d_out)), full((1, d_out)),              # layer 4
            ],
            out_specs=pl.BlockSpec((tile_rows, d_out), lambda i: (i, 0)),
        ),
        # VMEM per step (double-buffered x/out tiles + f32 intermediates) is
        # well under the default scoped limit at these feature widths.
        compiler_params=pltpu.CompilerParams(
            dimension_semantics=("parallel",)),
    )(x_in, w1c, b1c, w2c, b2c, w3c, b3c, w4c, b4c)

    return out[:N] if n_pad != N else out


def init_decoder_params(key, latent_dim, output_dim):
    """Deterministic synthetic init (PyTorch-Linear-like uniform fan-in scale)."""
    dims = [(latent_dim, latent_dim),
            (latent_dim, latent_dim),
            (latent_dim, latent_dim),
            (latent_dim, output_dim)]
    params = []
    for (fan_in, fan_out) in dims:
        key, kw, kb = jax.random.split(key, 3)
        bound = 1.0 / jnp.sqrt(fan_in)
        w = jax.random.uniform(kw, (fan_in, fan_out), jnp.float32, -bound, bound)
        b = jax.random.uniform(kb, (1, fan_out), jnp.float32, -bound, bound)
        params.append((w, b))
    return params


def decoder_reference(x, params):
    """Pure f32 reference (matches the PyTorch module's forward)."""
    (w1, b1), (w2, b2), (w3, b3), (w4, b4) = params
    h = jnp.maximum(x @ w1 + b1, 0.0)
    h = jnp.maximum(h @ w2 + b2, 0.0)
    h = jnp.maximum(h @ w3 + b3, 0.0)
    return h @ w4 + b4


if __name__ == "__main__":
    key = jax.random.PRNGKey(0)
    latent_dim = 32     # latent_dim_size
    output_dim = 16     # output_size
    num_nodes = 200     # graph.x has shape [num_nodes, latent_dim]; exercises
                        # the non-divisible-N padding path.

    kx, kp = jax.random.split(key)
    x = jax.random.normal(kx, (num_nodes, latent_dim), jnp.float32)
    params = init_decoder_params(kp, latent_dim, output_dim)

    out = decoder_forward(x, params)
    out = jax.block_until_ready(out)

    ref = decoder_reference(x, params)
    assert out.shape == (num_nodes, output_dim)
    # bf16 matmul inputs with f32 accumulation -> compare to f32 reference with
    # a tolerance consistent with bf16 rounding over 4 layers.
    assert jnp.allclose(out, ref, atol=2e-2, rtol=2e-2), "mismatch vs reference"

    print("KERNEL_OK")
</pallas_src>

<mosaic_0001>
module attributes {stable_mosaic.version = 11 : i64} {
  func.func @decoder_mlp_kernel(%arg0: i32, %arg1: memref<112x32xbf16, #tpu.memory_space<vmem>>, %arg2: memref<32x32xbf16, #tpu.memory_space<vmem>>, %arg3: memref<1x32xf32, #tpu.memory_space<vmem>>, %arg4: memref<32x32xbf16, #tpu.memory_space<vmem>>, %arg5: memref<1x32xf32, #tpu.memory_space<vmem>>, %arg6: memref<32x32xbf16, #tpu.memory_space<vmem>>, %arg7: memref<1x32xf32, #tpu.memory_space<vmem>>, %arg8: memref<32x16xbf16, #tpu.memory_space<vmem>>, %arg9: memref<1x16xf32, #tpu.memory_space<vmem>>, %arg10: memref<112x16xf32, #tpu.memory_space<vmem>>) attributes {dimension_semantics = [#tpu.dimension_semantics<parallel>], iteration_bounds = array<i64: 2>, scalar_prefetch = 0 : i64, scratch_operands = 0 : i64, tpu.core_type = #tpu.core_type<tc>, window_params = [{transform_indices = @transform_0, window_bounds = array<i64: 112, 32>}, {pipeline_mode = #tpu.pipeline_mode<synchronous>, transform_indices = @transform_1, window_bounds = array<i64: 32, 32>}, {pipeline_mode = #tpu.pipeline_mode<synchronous>, transform_indices = @transform_2, window_bounds = array<i64: 1, 32>}, {pipeline_mode = #tpu.pipeline_mode<synchronous>, transform_indices = @transform_3, window_bounds = array<i64: 32, 32>}, {pipeline_mode = #tpu.pipeline_mode<synchronous>, transform_indices = @transform_4, window_bounds = array<i64: 1, 32>}, {pipeline_mode = #tpu.pipeline_mode<synchronous>, transform_indices = @transform_5, window_bounds = array<i64: 32, 32>}, {pipeline_mode = #tpu.pipeline_mode<synchronous>, transform_indices = @transform_6, window_bounds = array<i64: 1, 32>}, {pipeline_mode = #tpu.pipeline_mode<synchronous>, transform_indices = @transform_7, window_bounds = array<i64: 32, 16>}, {pipeline_mode = #tpu.pipeline_mode<synchronous>, transform_indices = @transform_8, window_bounds = array<i64: 1, 16>}, {transform_indices = @transform_9, window_bounds = array<i64: 112, 16>}]} {
    %c0 = arith.constant 0 : index
    %c0_0 = arith.constant 0 : index
    %0 = vector.load %arg1[%c0, %c0_0] : memref<112x32xbf16, #tpu.memory_space<vmem>>, vector<112x32xbf16>
    %c0_1 = arith.constant 0 : index
    %c0_2 = arith.constant 0 : index
    %1 = vector.load %arg2[%c0_1, %c0_2] : memref<32x32xbf16, #tpu.memory_space<vmem>>, vector<32x32xbf16>
    %cst = arith.constant dense<0.000000e+00> : vector<112x32xf32>
    %2 = tpu.matmul %0, %1, %cst {dimension_numbers = #tpu.dot_dimension_numbers<[1], [0], [0], [1], [0, 0, 1, 1], [], []>} : vector<112x32xbf16>, vector<32x32xbf16>, vector<112x32xf32> -> vector<112x32xf32>
    %c0_3 = arith.constant 0 : index
    %c0_4 = arith.constant 0 : index
    %3 = vector.load %arg3[%c0_3, %c0_4] : memref<1x32xf32, #tpu.memory_space<vmem>>, vector<1x32xf32>
    %4 = vector.broadcast %3 : vector<1x32xf32> to vector<112x32xf32>
    %5 = arith.addf %2, %4 : vector<112x32xf32>
    %cst_5 = arith.constant 0.000000e+00 : f32
    %6 = vector.broadcast %cst_5 : f32 to vector<112x32xf32>
    %7 = arith.maximumf %5, %6 : vector<112x32xf32>
    %8 = arith.truncf %7 : vector<112x32xf32> to vector<112x32xbf16>
    %c0_6 = arith.constant 0 : index
    %c0_7 = arith.constant 0 : index
    %9 = vector.load %arg4[%c0_6, %c0_7] : memref<32x32xbf16, #tpu.memory_space<vmem>>, vector<32x32xbf16>
    %cst_8 = arith.constant dense<0.000000e+00> : vector<112x32xf32>
    %10 = tpu.matmul %8, %9, %cst_8 {dimension_numbers = #tpu.dot_dimension_numbers<[1], [0], [0], [1], [0, 0, 1, 1], [], []>} : vector<112x32xbf16>, vector<32x32xbf16>, vector<112x32xf32> -> vector<112x32xf32>
    %c0_9 = arith.constant 0 : index
    %c0_10 = arith.constant 0 : index
    %11 = vector.load %arg5[%c0_9, %c0_10] : memref<1x32xf32, #tpu.memory_space<vmem>>, vector<1x32xf32>
    %12 = vector.broadcast %11 : vector<1x32xf32> to vector<112x32xf32>
    %13 = arith.addf %10, %12 : vector<112x32xf32>
    %cst_11 = arith.constant 0.000000e+00 : f32
    %14 = vector.broadcast %cst_11 : f32 to vector<112x32xf32>
    %15 = arith.maximumf %13, %14 : vector<112x32xf32>
    %16 = arith.truncf %15 : vector<112x32xf32> to vector<112x32xbf16>
    %c0_12 = arith.constant 0 : index
    %c0_13 = arith.constant 0 : index
    %17 = vector.load %arg6[%c0_12, %c0_13] : memref<32x32xbf16, #tpu.memory_space<vmem>>, vector<32x32xbf16>
    %cst_14 = arith.constant dense<0.000000e+00> : vector<112x32xf32>
    %18 = tpu.matmul %16, %17, %cst_14 {dimension_numbers = #tpu.dot_dimension_numbers<[1], [0], [0], [1], [0, 0, 1, 1], [], []>} : vector<112x32xbf16>, vector<32x32xbf16>, vector<112x32xf32> -> vector<112x32xf32>
    %c0_15 = arith.constant 0 : index
    %c0_16 = arith.constant 0 : index
    %19 = vector.load %arg7[%c0_15, %c0_16] : memref<1x32xf32, #tpu.memory_space<vmem>>, vector<1x32xf32>
    %20 = vector.broadcast %19 : vector<1x32xf32> to vector<112x32xf32>
    %21 = arith.addf %18, %20 : vector<112x32xf32>
    %cst_17 = arith.constant 0.000000e+00 : f32
    %22 = vector.broadcast %cst_17 : f32 to vector<112x32xf32>
    %23 = arith.maximumf %21, %22 : vector<112x32xf32>
    %24 = arith.truncf %23 : vector<112x32xf32> to vector<112x32xbf16>
    %c0_18 = arith.constant 0 : index
    %c0_19 = arith.constant 0 : index
    %25 = vector.load %arg8[%c0_18, %c0_19] : memref<32x16xbf16, #tpu.memory_space<vmem>>, vector<32x16xbf16>
    %cst_20 = arith.constant dense<0.000000e+00> : vector<112x16xf32>
    %26 = tpu.matmul %24, %25, %cst_20 {dimension_numbers = #tpu.dot_dimension_numbers<[1], [0], [0], [1], [0, 0, 1, 1], [], []>} : vector<112x32xbf16>, vector<32x16xbf16>, vector<112x16xf32> -> vector<112x16xf32>
    %c0_21 = arith.constant 0 : index
    %c0_22 = arith.constant 0 : index
    %27 = vector.load %arg9[%c0_21, %c0_22] : memref<1x16xf32, #tpu.memory_space<vmem>>, vector<1x16xf32>
    %28 = vector.broadcast %27 : vector<1x16xf32> to vector<112x16xf32>
    %29 = arith.addf %26, %28 : vector<112x16xf32>
    %c0_23 = arith.constant 0 : index
    %c0_24 = arith.constant 0 : index
    %30 = vector.load %arg10[%c0_23, %c0_24] : memref<112x16xf32, #tpu.memory_space<vmem>>, vector<112x16xf32>
    tpu.vector_store %arg10[%c0_23, %c0_24], %29 {strides = array<i32>} : memref<112x16xf32, #tpu.memory_space<vmem>>, vector<112x16xf32>,
    return
  }
  func.func @transform_0(%arg0: i32) -> (i32, i32) {
    %c0_i32 = arith.constant 0 : i32
    %c0_i32_0 = arith.constant 0 : i32
    return %arg0, %c0_i32 : i32, i32
  }
  func.func @transform_1(%arg0: i32) -> (i32, i32) {
    %c0_i32 = arith.constant 0 : i32
    %c0_i32_0 = arith.constant 0 : i32
    %c0_i32_1 = arith.constant 0 : i32
    return %c0_i32, %c0_i32_0 : i32, i32
  }
  func.func @transform_2(%arg0: i32) -> (i32, i32) {
    %c0_i32 = arith.constant 0 : i32
    %c0_i32_0 = arith.constant 0 : i32
    %c0_i32_1 = arith.constant 0 : i32
    return %c0_i32, %c0_i32_0 : i32, i32
  }
  func.func @transform_3(%arg0: i32) -> (i32, i32) {
    %c0_i32 = arith.constant 0 : i32
    %c0_i32_0 = arith.constant 0 : i32
    %c0_i32_1 = arith.constant 0 : i32
    return %c0_i32, %c0_i32_0 : i32, i32
  }
  func.func @transform_4(%arg0: i32) -> (i32, i32) {
    %c0_i32 = arith.constant 0 : i32
    %c0_i32_0 = arith.constant 0 : i32
    %c0_i32_1 = arith.constant 0 : i32
    return %c0_i32, %c0_i32_0 : i32, i32
  }
  func.func @transform_5(%arg0: i32) -> (i32, i32) {
    %c0_i32 = arith.constant 0 : i32
    %c0_i32_0 = arith.constant 0 : i32
    %c0_i32_1 = arith.constant 0 : i32
    return %c0_i32, %c0_i32_0 : i32, i32
  }
  func.func @transform_6(%arg0: i32) -> (i32, i32) {
    %c0_i32 = arith.constant 0 : i32
    %c0_i32_0 = arith.constant 0 : i32
    %c0_i32_1 = arith.constant 0 : i32
    return %c0_i32, %c0_i32_0 : i32, i32
  }
  func.func @transform_7(%arg0: i32) -> (i32, i32) {
    %c0_i32 = arith.constant 0 : i32
    %c0_i32_0 = arith.constant 0 : i32
    %c0_i32_1 = arith.constant 0 : i32
    return %c0_i32, %c0_i32_0 : i32, i32
  }
  func.func @transform_8(%arg0: i32) -> (i32, i32) {
    %c0_i32 = arith.constant 0 : i32
    %c0_i32_0 = arith.constant 0 : i32
    %c0_i32_1 = arith.constant 0 : i32
    return %c0_i32, %c0_i32_0 : i32, i32
  }
  func.func @transform_9(%arg0: i32) -> (i32, i32) {
    %c0_i32 = arith.constant 0 : i32
    %c0_i32_0 = arith.constant 0 : i32
    return %arg0, %c0_i32 : i32, i32
  }
}

</mosaic_0001>

<llo_original>
// kernel: tpu_custom_call.1
$region0: #{tpu_custom_call.1}
  #allocation0 [shape = 'u32[]', space=smem, size = 0x4, offset = 0x4, fixed_abs, tag = 'smem constant byte address 0x4 - core index']
  #allocation1 [shape = 'u32[144,128]{1,0:T(1,128)}', space=vmem, size = 0x12000, scoped, tag = 'internal scratch']
  %s0 = inlined_call_operand.vmem [shape: bf16[224,32], index: 0, kind: input, shape index: {}]
  %s1 = inlined_call_operand.vmem [shape: bf16[32,32], index: 1, kind: input, shape index: {}]
  %s2 = inlined_call_operand.vmem [shape: f32[1,32], index: 2, kind: input, shape index: {}]
  %s3 = inlined_call_operand.vmem [shape: bf16[32,32], index: 3, kind: input, shape index: {}]
  %s4 = inlined_call_operand.vmem [shape: f32[1,32], index: 4, kind: input, shape index: {}]
  %s5 = inlined_call_operand.vmem [shape: bf16[32,32], index: 5, kind: input, shape index: {}]
  %s6 = inlined_call_operand.vmem [shape: f32[1,32], index: 6, kind: input, shape index: {}]
  %s7 = inlined_call_operand.vmem [shape: bf16[32,16], index: 7, kind: input, shape index: {}]
  %s8 = inlined_call_operand.vmem [shape: f32[1,16], index: 8, kind: input, shape index: {}]
  %s9 = inlined_call_operand.vmem [shape: f32[224,16], index: 9, kind: output, shape index: {}]
  %s10 = sld [smem:[#allocation0]]
  $region69: #{tpu_custom_call.1} parent=0
    _
  %s12 = ssub.s32 1, %s10
  %s13 = scalar_select 0, %s12, %s10
  loop: start=0, step=1, limit=4
  $region2: #{tpu_custom_call.1} parent=0 // loop_pre_header
    _
  $region3: #{tpu_custom_call.1} parent=0 // loop_header
    %s15 = sphi 0, %s19
    %p16 = scmp.ge.s32.totalorder %s15, 4
    %s25 = sphi 0, %s27
    %s28 = sphi 0, %s25
    %s29 = sphi 0, %s28
    %s45 = sphi 0, %s29
    %s49 = sphi 0, %s49
    %s51 = sphi 0, %s49
    %s52 = sphi 0, %s51
    %s66 = sphi 0, %s52
    %s70 = sphi 0, %s70
    %s72 = sphi 0, %s70
    %s73 = sphi 0, %s72
    %s87 = sphi 0, %s73
    %s91 = sphi 0, %s91
    %s93 = sphi 0, %s91
    %s94 = sphi 0, %s93
    %s108 = sphi 0, %s94
    %s112 = sphi 0, %s112
    %s114 = sphi 0, %s112
    %s115 = sphi 0, %s114
    %s129 = sphi 0, %s115
    %s133 = sphi 0, %s133
    %s135 = sphi 0, %s133
    %s136 = sphi 0, %s135
    %s150 = sphi 0, %s136
    %s154 = sphi 0, %s154
    %s156 = sphi 0, %s154
    %s157 = sphi 0, %s156
    %s171 = sphi 0, %s157
    %s175 = sphi 0, %s175
    %s177 = sphi 0, %s175
    %s178 = sphi 0, %s177
    %s192 = sphi 0, %s178
    %s196 = sphi 0, %s196
    %s198 = sphi 0, %s196
    %s199 = sphi 0, %s198
    %s213 = sphi 0, %s199
    %s219 = sphi 0, %s221
    %s222 = sphi 0, %s219
    %s223 = sphi 0, %s222
    %s239 = sphi 0, %s223
  $region4: #{tpu_custom_call.1} parent=0 // loop_header_branch
    %18 = sbr.rel (%p16) target = $region8
  $region5: #{tpu_custom_call.1} parent=0 // loop_body
    %s20 = ssub.s32 %s15, 1
    %s21 = ssub.s32 %s15, 2
    %s22 = sadd.s32 %s15, 1
    %s23 = ssub.s32 %s15, %s22
    %p24 = scmp.eq.s32.totalorder %s23, 0
    %s26 = sadd.s32 %s25, 1
    %s27 = scalar_select %p24, %s25, %s26
    %p30 = pneg %p24
    %p31 = scmp.eq.s32.totalorder %s15, 1
    %p32 = por %p30, %p31
    %p33 = scmp.ne.s32.totalorder %s25, %s28
    %p34 = scmp.eq.s32.totalorder %s15, 0
    %p35 = por %p33, %p34
    %p36 = scmp.ne.s32.totalorder %s25, %s28
    %p37 = scmp.eq.s32.totalorder %s20, 1
    %p38 = por %p36, %p37
    %p39 = scmp.ne.s32.totalorder %s28, %s29
    %p40 = scmp.eq.s32.totalorder %s20, 0
    %p41 = por %p39, %p40
    %p42 = scmp.ne.s32.totalorder %s28, %s29
    %p43 = scmp.eq.s32.totalorder %s21, 1
    %p44 = por %p42, %p43
    %p46 = scmp.ne.s32.totalorder %s29, %s45
    %p47 = scmp.eq.s32.totalorder %s21, 0
    %p48 = por %p46, %p47
    %s50 = sadd.s32 %s49, 1
    %p53 = scmp.eq.s32.totalorder %s15, 1
    %p54 = scmp.ne.s32.totalorder %s49, %s51
    %p55 = scmp.eq.s32.totalorder %s15, 0
    %p56 = por %p54, %p55
    %p57 = scmp.ne.s32.totalorder %s49, %s51
    %p58 = scmp.eq.s32.totalorder %s20, 1
    %p59 = por %p57, %p58
    %p60 = scmp.ne.s32.totalorder %s51, %s52
    %p61 = scmp.eq.s32.totalorder %s20, 0
    %p62 = por %p60, %p61
    %p63 = scmp.ne.s32.totalorder %s51, %s52
    %p64 = scmp.eq.s32.totalorder %s21, 1
    %p65 = por %p63, %p64
    %p67 = scmp.ne.s32.totalorder %s52, %s66
    %p68 = scmp.eq.s32.totalorder %s21, 0
    %p69 = por %p67, %p68
    %s71 = sadd.s32 %s70, 1
    %p74 = scmp.eq.s32.totalorder %s15, 1
    %p75 = scmp.ne.s32.totalorder %s70, %s72
    %p76 = scmp.eq.s32.totalorder %s15, 0
    %p77 = por %p75, %p76
    %p78 = scmp.ne.s32.totalorder %s70, %s72
    %p79 = scmp.eq.s32.totalorder %s20, 1
    %p80 = por %p78, %p79
    %p81 = scmp.ne.s32.totalorder %s72, %s73
    %p82 = scmp.eq.s32.totalorder %s20, 0
    %p83 = por %p81, %p82
    %p84 = scmp.ne.s32.totalorder %s72, %s73
    %p85 = scmp.eq.s32.totalorder %s21, 1
    %p86 = por %p84, %p85
    %p88 = scmp.ne.s32.totalorder %s73, %s87
    %p89 = scmp.eq.s32.totalorder %s21, 0
    %p90 = por %p88, %p89
    %s92 = sadd.s32 %s91, 1
    %p95 = scmp.eq.s32.totalorder %s15, 1
    %p96 = scmp.ne.s32.totalorder %s91, %s93
    %p97 = scmp.eq.s32.totalorder %s15, 0
    %p98 = por %p96, %p97
    %p99 = scmp.ne.s32.totalorder %s91, %s93
    %p100 = scmp.eq.s32.totalorder %s20, 1
    %p101 = por %p99, %p100
    %p102 = scmp.ne.s32.totalorder %s93, %s94
    %p103 = scmp.eq.s32.totalorder %s20, 0
    %p104 = por %p102, %p103
    %p105 = scmp.ne.s32.totalorder %s93, %s94
    %p106 = scmp.eq.s32.totalorder %s21, 1
    %p107 = por %p105, %p106
    %p109 = scmp.ne.s32.totalorder %s94, %s108
    %p110 = scmp.eq.s32.totalorder %s21, 0
    %p111 = por %p109, %p110
    %s113 = sadd.s32 %s112, 1
    %p116 = scmp.eq.s32.totalorder %s15, 1
    %p117 = scmp.ne.s32.totalorder %s112, %s114
    %p118 = scmp.eq.s32.totalorder %s15, 0
    %p119 = por %p117, %p118
    %p120 = scmp.ne.s32.totalorder %s112, %s114
    %p121 = scmp.eq.s32.totalorder %s20, 1
    %p122 = por %p120, %p121
    %p123 = scmp.ne.s32.totalorder %s114, %s115
    %p124 = scmp.eq.s32.totalorder %s20, 0
    %p125 = por %p123, %p124
    %p126 = scmp.ne.s32.totalorder %s114, %s115
    %p127 = scmp.eq.s32.totalorder %s21, 1
    %p128 = por %p126, %p127
    %p130 = scmp.ne.s32.totalorder %s115, %s129
    %p131 = scmp.eq.s32.totalorder %s21, 0
    %p132 = por %p130, %p131
    %s134 = sadd.s32 %s133, 1
    %p137 = scmp.eq.s32.totalorder %s15, 1
    %p138 = scmp.ne.s32.totalorder %s133, %s135
    %p139 = scmp.eq.s32.totalorder %s15, 0
    %p140 = por %p138, %p139
    %p141 = scmp.ne.s32.totalorder %s133, %s135
    %p142 = scmp.eq.s32.totalorder %s20, 1
    %p143 = por %p141, %p142
    %p144 = scmp.ne.s32.totalorder %s135, %s136
    %p145 = scmp.eq.s32.totalorder %s20, 0
    %p146 = por %p144, %p145
    %p147 = scmp.ne.s32.totalorder %s135, %s136
    %p148 = scmp.eq.s32.totalorder %s21, 1
    %p149 = por %p147, %p148
    %p151 = scmp.ne.s32.totalorder %s136, %s150
    %p152 = scmp.eq.s32.totalorder %s21, 0
    %p153 = por %p151, %p152
    %s155 = sadd.s32 %s154, 1
    %p158 = scmp.eq.s32.totalorder %s15, 1
    %p159 = scmp.ne.s32.totalorder %s154, %s156
    %p160 = scmp.eq.s32.totalorder %s15, 0
    %p161 = por %p159, %p160
    %p162 = scmp.ne.s32.totalorder %s154, %s156
    %p163 = scmp.eq.s32.totalorder %s20, 1
    %p164 = por %p162, %p163
    %p165 = scmp.ne.s32.totalorder %s156, %s157
    %p166 = scmp.eq.s32.totalorder %s20, 0
    %p167 = por %p165, %p166
    %p168 = scmp.ne.s32.totalorder %s156, %s157
    %p169 = scmp.eq.s32.totalorder %s21, 1
    %p170 = por %p168, %p169
    %p172 = scmp.ne.s32.totalorder %s157, %s171
    %p173 = scmp.eq.s32.totalorder %s21, 0
    %p174 = por %p172, %p173
    %s176 = sadd.s32 %s175, 1
    %p179 = scmp.eq.s32.totalorder %s15, 1
    %p180 = scmp.ne.s32.totalorder %s175, %s177
    %p181 = scmp.eq.s32.totalorder %s15, 0
    %p182 = por %p180, %p181
    %p183 = scmp.ne.s32.totalorder %s175, %s177
    %p184 = scmp.eq.s32.totalorder %s20, 1
    %p185 = por %p183, %p184
    %p186 = scmp.ne.s32.totalorder %s177, %s178
    %p187 = scmp.eq.s32.totalorder %s20, 0
    %p188 = por %p186, %p187
    %p189 = scmp.ne.s32.totalorder %s177, %s178
    %p190 = scmp.eq.s32.totalorder %s21, 1
    %p191 = por %p189, %p190
    %p193 = scmp.ne.s32.totalorder %s178, %s192
    %p194 = scmp.eq.s32.totalorder %s21, 0
    %p195 = por %p193, %p194
    %s197 = sadd.s32 %s196, 1
    %p200 = scmp.eq.s32.totalorder %s15, 1
    %p201 = scmp.ne.s32.totalorder %s196, %s198
    %p202 = scmp.eq.s32.totalorder %s15, 0
    %p203 = por %p201, %p202
    %p204 = scmp.ne.s32.totalorder %s196, %s198
    %p205 = scmp.eq.s32.totalorder %s20, 1
    %p206 = por %p204, %p205
    %p207 = scmp.ne.s32.totalorder %s198, %s199
    %p208 = scmp.eq.s32.totalorder %s20, 0
    %p209 = por %p207, %p208
    %p210 = scmp.ne.s32.totalorder %s198, %s199
    %p211 = scmp.eq.s32.totalorder %s21, 1
    %p212 = por %p210, %p211
    %p214 = scmp.ne.s32.totalorder %s199, %s213
    %p215 = scmp.eq.s32.totalorder %s21, 0
    %p216 = por %p214, %p215
    %s217 = ssub.s32 %s15, %s22
    %p218 = scmp.eq.s32.totalorder %s217, 0
    %s220 = sadd.s32 %s219, 1
    %s221 = scalar_select %p218, %s219, %s220
    %p224 = pneg %p218
    %p225 = scmp.eq.s32.totalorder %s15, 1
    %p226 = por %p224, %p225
    %p227 = scmp.ne.s32.totalorder %s219, %s222
    %p228 = scmp.eq.s32.totalorder %s15, 0
    %p229 = por %p227, %p228
    %p230 = scmp.ne.s32.totalorder %s219, %s222
    %p231 = scmp.eq.s32.totalorder %s20, 1
    %p232 = por %p230, %p231
    %p233 = scmp.ne.s32.totalorder %s222, %s223
    %p234 = scmp.eq.s32.totalorder %s20, 0
    %p235 = por %p233, %p234
    %p236 = scmp.ne.s32.totalorder %s222, %s223
    %p237 = scmp.eq.s32.totalorder %s21, 1
    %p238 = por %p236, %p237
    %p240 = scmp.ne.s32.totalorder %s223, %s239
    %p241 = scmp.eq.s32.totalorder %s21, 0
    %p242 = por %p240, %p241
    %p243 = scmp.le.s32.totalorder 1, %s15
    %p244 = scmp.lt.s32.totalorder %s15, 3
    %p245 = pnand %p243, %p244
    %p246 = pneg %p245
    // Predicated region
    $region9: #{tpu_custom_call.1} parent=5 // pred_check
      _
    $region10: #{tpu_custom_call.1} parent=5 // pred_check_branch
      %248 = sbr.rel (%p245) target = $region12
    $region11: #{tpu_custom_call.1} parent=5 // pred_region
      %s249 = ssub.s32 %s15, 1
      // Predicated region
      $region13: #{tpu_custom_call.1} parent=11 // pred_check
        %p250 = pneg %p62
      $region14: #{tpu_custom_call.1} parent=11 // pred_check_branch
        %252 = sbr.rel (%p250) target = $region16
      $region15: #{tpu_custom_call.1} parent=11 // pred_region
        _
      $region16: #{tpu_custom_call.1} parent=11 // pred_fallthru
        _
      // Predicated region
      $region17: #{tpu_custom_call.1} parent=11 // pred_check
        %p253 = pneg %p83
      $region18: #{tpu_custom_call.1} parent=11 // pred_check_branch
        %255 = sbr.rel (%p253) target = $region20
      $region19: #{tpu_custom_call.1} parent=11 // pred_region
        _
      $region20: #{tpu_custom_call.1} parent=11 // pred_fallthru
        _
      // Predicated region
      $region21: #{tpu_custom_call.1} parent=11 // pred_check
        %p256 = pneg %p104
      $region22: #{tpu_custom_call.1} parent=11 // pred_check_branch
        %258 = sbr.rel (%p256) target = $region24
      $region23: #{tpu_custom_call.1} parent=11 // pred_region
        _
      $region24: #{tpu_custom_call.1} parent=11 // pred_fallthru
        _
      // Predicated region
      $region25: #{tpu_custom_call.1} parent=11 // pred_check
        %p259 = pneg %p125
      $region26: #{tpu_custom_call.1} parent=11 // pred_check_branch
        %261 = sbr.rel (%p259) target = $region28
      $region27: #{tpu_custom_call.1} parent=11 // pred_region
        _
      $region28: #{tpu_custom_call.1} parent=11 // pred_fallthru
        _
      // Predicated region
      $region29: #{tpu_custom_call.1} parent=11 // pred_check
        %p262 = pneg %p146
      $region30: #{tpu_custom_call.1} parent=11 // pred_check_branch
        %264 = sbr.rel (%p262) target = $region32
      $region31: #{tpu_custom_call.1} parent=11 // pred_region
        _
      $region32: #{tpu_custom_call.1} parent=11 // pred_fallthru
        _
      // Predicated region
      $region33: #{tpu_custom_call.1} parent=11 // pred_check
        %p265 = pneg %p167
      $region34: #{tpu_custom_call.1} parent=11 // pred_check_branch
        %267 = sbr.rel (%p265) target = $region36
      $region35: #{tpu_custom_call.1} parent=11 // pred_region
        _
      $region36: #{tpu_custom_call.1} parent=11 // pred_fallthru
        _
      // Predicated region
      $region37: #{tpu_custom_call.1} parent=11 // pred_check
        %p268 = pneg %p188
      $region38: #{tpu_custom_call.1} parent=11 // pred_check_branch
        %270 = sbr.rel (%p268) target = $region40
      $region39: #{tpu_custom_call.1} parent=11 // pred_region
        _
      $region40: #{tpu_custom_call.1} parent=11 // pred_fallthru
        _
      // Predicated region
      $region41: #{tpu_custom_call.1} parent=11 // pred_check
        %p271 = pneg %p209
      $region42: #{tpu_custom_call.1} parent=11 // pred_check_branch
        %273 = sbr.rel (%p271) target = $region44
      $region43: #{tpu_custom_call.1} parent=11 // pred_region
        _
      $region44: #{tpu_custom_call.1} parent=11 // pred_fallthru
        _
    $region12: #{tpu_custom_call.1} parent=5 // pred_fallthru
      _
    %p274 = scmp.lt.s32.totalorder %s15, 2
    // Predicated region
    $region45: #{tpu_custom_call.1} parent=5 // pred_check
      %p275 = pneg %p274
    $region46: #{tpu_custom_call.1} parent=5 // pred_check_branch
      %277 = sbr.rel (%p275) target = $region48
    $region47: #{tpu_custom_call.1} parent=5 // pred_region
      // Predicated region
      $region49: #{tpu_custom_call.1} parent=47 // pred_check
        %p278 = pneg %p35
      $region50: #{tpu_custom_call.1} parent=47 // pred_check_branch
        %280 = sbr.rel (%p278) target = $region52
      $region51: #{tpu_custom_call.1} parent=47 // pred_region
        %s281 = smul.u32 14, %s15
        %p282 = scmp.lt.s32.totalorder %s281, 27
        %s283 = scalar_select %p282, %s281, 27
        %s284 = smul.addr %s283, 4
        %s285 = scalar_lea.vmem %s0, %s284
        %s286 = smul.u32 14, %s15
      $region52: #{tpu_custom_call.1} parent=47 // pred_fallthru
        _
    $region48: #{tpu_custom_call.1} parent=5 // pred_fallthru
      _
    %p287 = scmp.le.s32.totalorder 1, %s15
    %p288 = scmp.lt.s32.totalorder %s15, 3
    %p289 = pnand %p287, %p288
    %p290 = pneg %p289
    // Predicated region
    $region53: #{tpu_custom_call.1} parent=5 // pred_check
      _
    $region54: #{tpu_custom_call.1} parent=5 // pred_check_branch
      %292 = sbr.rel (%p289) target = $region56
    $region55: #{tpu_custom_call.1} parent=5 // pred_region
      %s293 = ssub.s32 %s15, 1
      %s294 = smul.u32 14, %s20
      %p295 = scmp.lt.s32.totalorder %s294, 27
      %s296 = scalar_select %p295, %s294, 27
      %s297 = smul.addr %s296, 4
      %s298 = scalar_lea.vmem %s0, %s297
      %p299 = pneg %p41
      %p300 = pneg %p38
      %p301 = pneg %p62
      %p302 = pneg %p59
      %p303 = pneg %p83
      %p304 = pneg %p80
      %p305 = pneg %p104
      %p306 = pneg %p101
      %p307 = pneg %p125
      %p308 = pneg %p122
      %p309 = pneg %p146
      %p310 = pneg %p143
      %p311 = pneg %p167
      %p312 = pneg %p164
      %p313 = pneg %p188
      %p314 = pneg %p185
      %p315 = pneg %p209
      %p316 = pneg %p206
      %p317 = pneg %p235
      %p318 = pneg %p232
      %s319 = smul.u32 14, %s20
      %p320 = scmp.lt.s32.totalorder %s319, 27
      %s321 = scalar_select %p320, %s319, 27
      %s322 = smul.addr %s321, 8
      %s323 = scalar_lea.vmem %s9, %s322
      %s324 = smul.u32 14, %s20
      %p325 = scmp.lt.s32.totalorder %s324, 27
      %s326 = scalar_select %p325, %s324, 27
      %s327 = smul.addr %s326, 4
      %s328 = scalar_lea.vmem %s0, %s327
      %s329 = smul.u32 14, %s20
      %s330 = smul.u32 14, %s20
      %p331 = scmp.lt.s32.totalorder %s330, 27
      %s332 = scalar_select %p331, %s330, 27
      %s333 = smul.addr %s332, 8
      %s334 = scalar_lea.vmem %s9, %s333
      %s335 = smul.u32 14, %s20
      %v337 = vld [vmem:[%s328] sm:$0xf]
      %v338 = vld [vmem:[%s328 + $0x4] sm:$0xf]
      %v339 = vld [vmem:[%s328 + $0x8] sm:$0xf]
      %v340 = vld [vmem:[%s328 + $0xc] sm:$0xf]
      %v341 = vld [vmem:[%s328 + $0x10] sm:$0xf]
      %v342 = vld [vmem:[%s328 + $0x14] sm:$0xf]
      %v343 = vld [vmem:[%s328 + $0x18] sm:$0xf]
      %v344 = vld [vmem:[%s328 + $0x1c] sm:$0xf]
      %v345 = vld [vmem:[%s328 + $0x20] sm:$0xf]
      %v346 = vld [vmem:[%s328 + $0x24] sm:$0xf]
      %v347 = vld [vmem:[%s328 + $0x28] sm:$0xf]
      %v348 = vld [vmem:[%s328 + $0x2c] sm:$0xf]
      %v349 = vld [vmem:[%s328 + $0x30] sm:$0xf]
      %v350 = vld [vmem:[%s328 + $0x34] sm:$0xf]
      %v351 = vld [vmem:[%s1] sm:$0xf]
      %v352 = vld [vmem:[%s1 + $0x4] sm:$0xf]
      %v353 = vld [vmem:[%s1 + $0x8] sm:$0xf]
      %v354 = vld [vmem:[%s1 + $0xc] sm:$0xf]
      %v355 = vld [vmem:[%s2] sm:$0x1]
      %v357 = vlaneseq
      %v358 = vshrl.u32 %v357, 7
      %v359 = vsub.s32 0, %v358
      %v360 = vrot.slane %v355, %v359
      %v376 = vunpack.c.l.b16 %v337
      %v377 = vunpack.c.l.b16 %v338
      %v378 = vunpack.c.l.b16 %v339
      %v379 = vunpack.c.l.b16 %v340
      %v380 = vunpack.c.l.b16 %v341
      %v381 = vunpack.c.l.b16 %v342
      %v382 = vunpack.c.l.b16 %v343
      %v383 = vunpack.c.l.b16 %v344
      %v384 = vunpack.c.l.b16 %v345
      %v385 = vunpack.c.l.b16 %v346
      %v386 = vunpack.c.l.b16 %v347
      %v387 = vunpack.c.l.b16 %v348
      %v388 = vunpack.c.l.b16 %v349
      %v389 = vunpack.c.l.b16 %v350
      %v390 = vpack.c.b16 %v377, %v376
      %v391 = vpack.c.b16 %v379, %v378
      %v392 = vpack.c.b16 %v381, %v380
      %v393 = vpack.c.b16 %v383, %v382
      %v394 = vpack.c.b16 %v385, %v384
      %v395 = vpack.c.b16 %v387, %v386
      %v396 = vpack.c.b16 %v389, %v388
      %v401 = vunpack.c.l.b16 %v351
      %v402 = vunpack.c.l.b16 %v352
      %v403 = vunpack.c.l.b16 %v353
      %v404 = vunpack.c.l.b16 %v354
      %v405 = vpack.c.b16 %v402, %v401
      %v406 = vpack.c.b16 %v404, %v403
      %vm409 = vcmask 261120
      %v411 = vsel %vm409, %v390, 0
      %v414 = vsel %vm409, %v391, 0
      %v417 = vsel %vm409, %v392, 0
      %v420 = vsel %vm409, %v393, 0
      %v423 = vsel %vm409, %v394, 0
      %v426 = vsel %vm409, %v395, 0
      %v429 = vsel %vm409, %v396, 0
      %431 = vmatprep.subr.bf16.mxu0 0
      %432 = vmatpush1.bf16.msra.mxu0 %v405
      %433 = vmatprep.subr.bf16.mxu0 0
      %434 = vmatpush1.bf16.msra.mxu0 %v406
      %435 = vmatprep.subr.bf16.mxu0 0
      %436 = vmatpush1.bf16.msra.mxu0 0
      %437 = vmatprep.subr.bf16.mxu0 0
      %438 = vmatpush1.bf16.msra.mxu0 0
      %439 = vmatprep.subr.bf16.mxu0 0
      %440 = vmatpush1.bf16.msra.mxu0 0
      %441 = vmatprep.subr.bf16.mxu0 0
      %442 = vmatpush1.bf16.msra.mxu0 0
      %443 = vmatprep.subr.bf16.mxu0 0
      %444 = vmatpush1.bf16.msra.mxu0 0
      %445 = vmatprep.subr.bf16.mxu0 0
      %446 = vmatpush1.bf16.msra.mxu0 0
      %447 = vmatprep.subr.bf16.mxu0 0
      %448 = vmatpush1.bf16.msra.mxu0 0
      %449 = vmatprep.subr.bf16.mxu0 0
      %450 = vmatpush1.bf16.msra.mxu0 0
      %451 = vmatprep.subr.bf16.mxu0 0
      %452 = vmatpush1.bf16.msra.mxu0 0
      %453 = vmatprep.subr.bf16.mxu0 0
      %454 = vmatpush1.bf16.msra.mxu0 0
      %455 = vmatprep.subr.bf16.mxu0 0
      %456 = vmatpush1.bf16.msra.mxu0 0
      %457 = vmatprep.subr.bf16.mxu0 0
      %458 = vmatpush1.bf16.msra.mxu0 0
      %459 = vmatprep.subr.bf16.mxu0 0
      %460 = vmatpush1.bf16.msra.mxu0 0
      %461 = vmatprep.subr.bf16.mxu0 0
      %462 = vmatpush1.bf16.msra.mxu0 0
      %463 = vmatprep.mubr.bf16.mxu0 0
      %464 = vmatmul.mubr.bf16.gmra.mrb[0].mxu0 %v411
      %v465 = vpop.f32.mrb[0].mxu0
      %v466 = vadd.f32 %v360, %v465
      %v467 = vpop.f32.mrb[0].mxu0
      %v468 = vpop.f32.mrb[0].mxu0
      %v469 = vadd.f32 %v360, %v468
      %v470 = vpop.f32.mrb[0].mxu0
      %471 = vmatprep.mubr.bf16.mxu0 0
      %472 = vmatmul.mubr.bf16.gmra.mrb[0].mxu0 %v414
      %v473 = vpop.f32.mrb[0].mxu0
      %v474 = vadd.f32 %v360, %v473
      %v475 = vpop.f32.mrb[0].mxu0
      %v476 = vpop.f32.mrb[0].mxu0
      %v477 = vadd.f32 %v360, %v476
      %v478 = vpop.f32.mrb[0].mxu0
      %479 = vmatprep.mubr.bf16.mxu0 0
      %480 = vmatmul.mubr.bf16.gmra.mrb[0].mxu0 %v417
      %v481 = vpop.f32.mrb[0].mxu0
      %v482 = vadd.f32 %v360, %v481
      %v483 = vpop.f32.mrb[0].mxu0
      %v484 = vpop.f32.mrb[0].mxu0
      %v485 = vadd.f32 %v360, %v484
      %v486 = vpop.f32.mrb[0].mxu0
      %487 = vmatprep.mubr.bf16.mxu0 0
      %488 = vmatmul.mubr.bf16.gmra.mrb[0].mxu0 %v420
      %v489 = vpop.f32.mrb[0].mxu0
      %v490 = vadd.f32 %v360, %v489
      %v491 = vpop.f32.mrb[0].mxu0
      %v492 = vpop.f32.mrb[0].mxu0
      %v493 = vadd.f32 %v360, %v492
      %v494 = vpop.f32.mrb[0].mxu0
      %495 = vmatprep.mubr.bf16.mxu0 0
      %496 = vmatmul.mubr.bf16.gmra.mrb[0].mxu0 %v423
      %v497 = vpop.f32.mrb[0].mxu0
      %v498 = vadd.f32 %v360, %v497
      %v499 = vpop.f32.mrb[0].mxu0
      %v500 = vpop.f32.mrb[0].mxu0
      %v501 = vadd.f32 %v360, %v500
      %v502 = vpop.f32.mrb[0].mxu0
      %503 = vmatprep.mubr.bf16.mxu0 0
      %504 = vmatmul.mubr.bf16.gmra.mrb[0].mxu0 %v426
      %v505 = vpop.f32.mrb[0].mxu0
      %v506 = vadd.f32 %v360, %v505
      %v507 = vpop.f32.mrb[0].mxu0
      %v508 = vpop.f32.mrb[0].mxu0
      %v509 = vadd.f32 %v360, %v508
      %v510 = vpop.f32.mrb[0].mxu0
      %511 = vmatprep.mubr.bf16.mxu0 0
      %512 = vmatmul.mubr.bf16.gmra.mrb[0].mxu0 %v429
      %v513 = vpop.f32.mrb[0].mxu0
      %v514 = vadd.f32 %v360, %v513
      %v515 = vpop.f32.mrb[0].mxu0
      %v516 = vpop.f32.mrb[0].mxu0
      %v517 = vadd.f32 %v360, %v516
      %v518 = vpop.f32.mrb[0].mxu0
      %519 = vdwg.mxu0
      %v520 = vmax.f32 %v466, 0.0
      %v521 = vmax.f32 %v469, 0.0
      %v522 = vmax.f32 %v474, 0.0
      %v523 = vmax.f32 %v477, 0.0
      %v524 = vmax.f32 %v482, 0.0
      %v525 = vmax.f32 %v485, 0.0
      %v526 = vmax.f32 %v490, 0.0
      %v527 = vmax.f32 %v493, 0.0
      %v528 = vmax.f32 %v498, 0.0
      %v529 = vmax.f32 %v501, 0.0
      %v530 = vmax.f32 %v506, 0.0
      %v531 = vmax.f32 %v509, 0.0
      %v532 = vmax.f32 %v514, 0.0
      %v533 = vmax.f32 %v517, 0.0
      %v534 = vpack.c.bf16 %v521, %v520
      %v535 = vpack.c.bf16 %v523, %v522
      %v536 = vpack.c.bf16 %v525, %v524
      %v537 = vpack.c.bf16 %v527, %v526
      %v538 = vpack.c.bf16 %v529, %v528
      %v539 = vpack.c.bf16 %v531, %v530
      %v540 = vpack.c.bf16 %v533, %v532
      %v541 = vld [vmem:[%s3] sm:$0xf]
      %v542 = vld [vmem:[%s3 + $0x4] sm:$0xf]
      %v543 = vld [vmem:[%s3 + $0x8] sm:$0xf]
      %v544 = vld [vmem:[%s3 + $0xc] sm:$0xf]
      %v545 = vld [vmem:[%s4] sm:$0x1]
      %v547 = vlaneseq
      %v548 = vshrl.u32 %v547, 7
      %v549 = vsub.s32 0, %v548
      %v550 = vrot.slane %v545, %v549
      %v556 = vunpack.c.l.b16 %v541
      %v557 = vunpack.c.l.b16 %v542
      %v558 = vunpack.c.l.b16 %v543
      %v559 = vunpack.c.l.b16 %v544
      %v560 = vpack.c.b16 %v557, %v556
      %v561 = vpack.c.b16 %v559, %v558
      %v565 = vsel %vm409, %v534, 0
      %v568 = vsel %vm409, %v535, 0
      %v571 = vsel %vm409, %v536, 0
      %v574 = vsel %vm409, %v537, 0
      %v577 = vsel %vm409, %v538, 0
      %v580 = vsel %vm409, %v539, 0
      %v583 = vsel %vm409, %v540, 0
      %585 = vmatprep.subr.bf16.mxu0 0
      %586 = vmatpush1.bf16.msra.mxu0 %v560
      %587 = vmatprep.subr.bf16.mxu0 0
      %588 = vmatpush1.bf16.msra.mxu0 %v561
      %589 = vmatprep.subr.bf16.mxu0 0
      %590 = vmatpush1.bf16.msra.mxu0 0
      %591 = vmatprep.subr.bf16.mxu0 0
      %592 = vmatpush1.bf16.msra.mxu0 0
      %593 = vmatprep.subr.bf16.mxu0 0
      %594 = vmatpush1.bf16.msra.mxu0 0
      %595 = vmatprep.subr.bf16.mxu0 0
      %596 = vmatpush1.bf16.msra.mxu0 0
      %597 = vmatprep.subr.bf16.mxu0 0
      %598 = vmatpush1.bf16.msra.mxu0 0
      %599 = vmatprep.subr.bf16.mxu0 0
      %600 = vmatpush1.bf16.msra.mxu0 0
      %601 = vmatprep.subr.bf16.mxu0 0
      %602 = vmatpush1.bf16.msra.mxu0 0
      %603 = vmatprep.subr.bf16.mxu0 0
      %604 = vmatpush1.bf16.msra.mxu0 0
      %605 = vmatprep.subr.bf16.mxu0 0
      %606 = vmatpush1.bf16.msra.mxu0 0
      %607 = vmatprep.subr.bf16.mxu0 0
      %608 = vmatpush1.bf16.msra.mxu0 0
      %609 = vmatprep.subr.bf16.mxu0 0
      %610 = vmatpush1.bf16.msra.mxu0 0
      %611 = vmatprep.subr.bf16.mxu0 0
      %612 = vmatpush1.bf16.msra.mxu0 0
      %613 = vmatprep.subr.bf16.mxu0 0
      %614 = vmatpush1.bf16.msra.mxu0 0
      %615 = vmatprep.subr.bf16.mxu0 0
      %616 = vmatpush1.bf16.msra.mxu0 0
      %617 = vmatprep.mubr.bf16.mxu0 0
      %618 = vmatmul.mubr.bf16.gmra.mrb[0].mxu0 %v565
      %v619 = vpop.f32.mrb[0].mxu0
      %v620 = vadd.f32 %v550, %v619
      %v621 = vpop.f32.mrb[0].mxu0
      %v622 = vpop.f32.mrb[0].mxu0
      %v623 = vadd.f32 %v550, %v622
      %v624 = vpop.f32.mrb[0].mxu0
      %625 = vmatprep.mubr.bf16.mxu0 0
      %626 = vmatmul.mubr.bf16.gmra.mrb[0].mxu0 %v568
      %v627 = vpop.f32.mrb[0].mxu0
      %v628 = vadd.f32 %v550, %v627
      %v629 = vpop.f32.mrb[0].mxu0
      %v630 = vpop.f32.mrb[0].mxu0
      %v631 = vadd.f32 %v550, %v630
      %v632 = vpop.f32.mrb[0].mxu0
      %633 = vmatprep.mubr.bf16.mxu0 0
      %634 = vmatmul.mubr.bf16.gmra.mrb[0].mxu0 %v571
      %v635 = vpop.f32.mrb[0].mxu0
      %v636 = vadd.f32 %v550, %v635
      %v637 = vpop.f32.mrb[0].mxu0
      %v638 = vpop.f32.mrb[0].mxu0
      %v639 = vadd.f32 %v550, %v638
      %v640 = vpop.f32.mrb[0].mxu0
      %641 = vmatprep.mubr.bf16.mxu0 0
      %642 = vmatmul.mubr.bf16.gmra.mrb[0].mxu0 %v574
      %v643 = vpop.f32.mrb[0].mxu0
      %v644 = vadd.f32 %v550, %v643
      %v645 = vpop.f32.mrb[0].mxu0
      %v646 = vpop.f32.mrb[0].mxu0
      %v647 = vadd.f32 %v550, %v646
      %v648 = vpop.f32.mrb[0].mxu0
      %649 = vmatprep.mubr.bf16.mxu0 0
      %650 = vmatmul.mubr.bf16.gmra.mrb[0].mxu0 %v577
      %v651 = vpop.f32.mrb[0].mxu0
      %v652 = vadd.f32 %v550, %v651
      %v653 = vpop.f32.mrb[0].mxu0
      %v654 = vpop.f32.mrb[0].mxu0
      %v655 = vadd.f32 %v550, %v654
      %v656 = vpop.f32.mrb[0].mxu0
      %657 = vmatprep.mubr.bf16.mxu0 0
      %658 = vmatmul.mubr.bf16.gmra.mrb[0].mxu0 %v580
      %v659 = vpop.f32.mrb[0].mxu0
      %v660 = vadd.f32 %v550, %v659
      %v661 = vpop.f32.mrb[0].mxu0
      %v662 = vpop.f32.mrb[0].mxu0
      %v663 = vadd.f32 %v550, %v662
      %v664 = vpop.f32.mrb[0].mxu0
      %665 = vmatprep.mubr.bf16.mxu0 0
      %666 = vmatmul.mubr.bf16.gmra.mrb[0].mxu0 %v583
      %v667 = vpop.f32.mrb[0].mxu0
      %v668 = vadd.f32 %v550, %v667
      %v669 = vpop.f32.mrb[0].mxu0
      %v670 = vpop.f32.mrb[0].mxu0
      %v671 = vadd.f32 %v550, %v670
      %v672 = vpop.f32.mrb[0].mxu0
      %673 = vdwg.mxu0
      %v674 = vmax.f32 %v620, 0.0
      %v675 = vmax.f32 %v623, 0.0
      %v676 = vmax.f32 %v628, 0.0
      %v677 = vmax.f32 %v631, 0.0
      %v678 = vmax.f32 %v636, 0.0
      %v679 = vmax.f32 %v639, 0.0
      %v680 = vmax.f32 %v644, 0.0
      %v681 = vmax.f32 %v647, 0.0
      %v682 = vmax.f32 %v652, 0.0
      %v683 = vmax.f32 %v655, 0.0
      %v684 = vmax.f32 %v660, 0.0
      %v685 = vmax.f32 %v663, 0.0
      %v686 = vmax.f32 %v668, 0.0
      %v687 = vmax.f32 %v671, 0.0
      %v688 = vpack.c.bf16 %v675, %v674
      %v689 = vpack.c.bf16 %v677, %v676
      %v690 = vpack.c.bf16 %v679, %v678
      %v691 = vpack.c.bf16 %v681, %v680
      %v692 = vpack.c.bf16 %v683, %v682
      %v693 = vpack.c.bf16 %v685, %v684
      %v694 = vpack.c.bf16 %v687, %v686
      %v695 = vld [vmem:[%s5] sm:$0xf]
      %v696 = vld [vmem:[%s5 + $0x4] sm:$0xf]
      %v697 = vld [vmem:[%s5 + $0x8] sm:$0xf]
      %v698 = vld [vmem:[%s5 + $0xc] sm:$0xf]
      %v699 = vld [vmem:[%s6] sm:$0x1]
      %v701 = vlaneseq
      %v702 = vshrl.u32 %v701, 7
      %v703 = vsub.s32 0, %v702
      %v704 = vrot.slane %v699, %v703
      %v710 = vunpack.c.l.b16 %v695
      %v711 = vunpack.c.l.b16 %v696
      %v712 = vunpack.c.l.b16 %v697
      %v713 = vunpack.c.l.b16 %v698
      %v714 = vpack.c.b16 %v711, %v710
      %v715 = vpack.c.b16 %v713, %v712
      %v719 = vsel %vm409, %v688, 0
      %v722 = vsel %vm409, %v689, 0
      %v725 = vsel %vm409, %v690, 0
      %v728 = vsel %vm409, %v691, 0
      %v731 = vsel %vm409, %v692, 0
      %v734 = vsel %vm409, %v693, 0
      %v737 = vsel %vm409, %v694, 0
      %739 = vmatprep.subr.bf16.mxu0 0
      %740 = vmatpush1.bf16.msra.mxu0 %v714
      %741 = vmatprep.subr.bf16.mxu0 0
      %742 = vmatpush1.bf16.msra.mxu0 %v715
      %743 = vmatprep.subr.bf16.mxu0 0
      %744 = vmatpush1.bf16.msra.mxu0 0
      %745 = vmatprep.subr.bf16.mxu0 0
      %746 = vmatpush1.bf16.msra.mxu0 0
      %747 = vmatprep.subr.bf16.mxu0 0
      %748 = vmatpush1.bf16.msra.mxu0 0
      %749 = vmatprep.subr.bf16.mxu0 0
      %750 = vmatpush1.bf16.msra.mxu0 0
      %751 = vmatprep.subr.bf16.mxu0 0
      %752 = vmatpush1.bf16.msra.mxu0 0
      %753 = vmatprep.subr.bf16.mxu0 0
      %754 = vmatpush1.bf16.msra.mxu0 0
      %755 = vmatprep.subr.bf16.mxu0 0
      %756 = vmatpush1.bf16.msra.mxu0 0
      %757 = vmatprep.subr.bf16.mxu0 0
      %758 = vmatpush1.bf16.msra.mxu0 0
      %759 = vmatprep.subr.bf16.mxu0 0
      %760 = vmatpush1.bf16.msra.mxu0 0
      %761 = vmatprep.subr.bf16.mxu0 0
      %762 = vmatpush1.bf16.msra.mxu0 0
      %763 = vmatprep.subr.bf16.mxu0 0
      %764 = vmatpush1.bf16.msra.mxu0 0
      %765 = vmatprep.subr.bf16.mxu0 0
      %766 = vmatpush1.bf16.msra.mxu0 0
      %767 = vmatprep.subr.bf16.mxu0 0
      %768 = vmatpush1.bf16.msra.mxu0 0
      %769 = vmatprep.subr.bf16.mxu0 0
      %770 = vmatpush1.bf16.msra.mxu0 0
      %771 = vmatprep.mubr.bf16.mxu0 0
      %772 = vmatmul.mubr.bf16.gmra.mrb[0].mxu0 %v719
      %v773 = vpop.f32.mrb[0].mxu0
      %v774 = vadd.f32 %v704, %v773
      %v775 = vpop.f32.mrb[0].mxu0
      %v776 = vpop.f32.mrb[0].mxu0
      %v777 = vadd.f32 %v704, %v776
      %v778 = vpop.f32.mrb[0].mxu0
      %779 = vmatprep.mubr.bf16.mxu0 0
      %780 = vmatmul.mubr.bf16.gmra.mrb[0].mxu0 %v722
      %v781 = vpop.f32.mrb[0].mxu0
      %v782 = vadd.f32 %v704, %v781
      %v783 = vpop.f32.mrb[0].mxu0
      %v784 = vpop.f32.mrb[0].mxu0
      %v785 = vadd.f32 %v704, %v784
      %v786 = vpop.f32.mrb[0].mxu0
      %787 = vmatprep.mubr.bf16.mxu0 0
      %788 = vmatmul.mubr.bf16.gmra.mrb[0].mxu0 %v725
      %v789 = vpop.f32.mrb[0].mxu0
      %v790 = vadd.f32 %v704, %v789
      %v791 = vpop.f32.mrb[0].mxu0
      %v792 = vpop.f32.mrb[0].mxu0
      %v793 = vadd.f32 %v704, %v792
      %v794 = vpop.f32.mrb[0].mxu0
      %795 = vmatprep.mubr.bf16.mxu0 0
      %796 = vmatmul.mubr.bf16.gmra.mrb[0].mxu0 %v728
      %v797 = vpop.f32.mrb[0].mxu0
      %v798 = vadd.f32 %v704, %v797
      %v799 = vpop.f32.mrb[0].mxu0
      %v800 = vpop.f32.mrb[0].mxu0
      %v801 = vadd.f32 %v704, %v800
      %v802 = vpop.f32.mrb[0].mxu0
      %803 = vmatprep.mubr.bf16.mxu0 0
      %804 = vmatmul.mubr.bf16.gmra.mrb[0].mxu0 %v731
      %v805 = vpop.f32.mrb[0].mxu0
      %v806 = vadd.f32 %v704, %v805
      %v807 = vpop.f32.mrb[0].mxu0
      %v808 = vpop.f32.mrb[0].mxu0
      %v809 = vadd.f32 %v704, %v808
      %v810 = vpop.f32.mrb[0].mxu0
      %811 = vmatprep.mubr.bf16.mxu0 0
      %812 = vmatmul.mubr.bf16.gmra.mrb[0].mxu0 %v734
      %v813 = vpop.f32.mrb[0].mxu0
      %v814 = vadd.f32 %v704, %v813
      %v815 = vpop.f32.mrb[0].mxu0
      %v816 = vpop.f32.mrb[0].mxu0
      %v817 = vadd.f32 %v704, %v816
      %v818 = vpop.f32.mrb[0].mxu0
      %819 = vmatprep.mubr.bf16.mxu0 0
      %820 = vmatmul.mubr.bf16.gmra.mrb[0].mxu0 %v737
      %v821 = vpop.f32.mrb[0].mxu0
      %v822 = vadd.f32 %v704, %v821
      %v823 = vpop.f32.mrb[0].mxu0
      %v824 = vpop.f32.mrb[0].mxu0
      %v825 = vadd.f32 %v704, %v824
      %v826 = vpop.f32.mrb[0].mxu0
      %827 = vdwg.mxu0
      %v828 = vmax.f32 %v774, 0.0
      %v829 = vmax.f32 %v777, 0.0
      %v830 = vmax.f32 %v782, 0.0
      %v831 = vmax.f32 %v785, 0.0
      %v832 = vmax.f32 %v790, 0.0
      %v833 = vmax.f32 %v793, 0.0
      %v834 = vmax.f32 %v798, 0.0
      %v835 = vmax.f32 %v801, 0.0
      %v836 = vmax.f32 %v806, 0.0
      %v837 = vmax.f32 %v809, 0.0
      %v838 = vmax.f32 %v814, 0.0
      %v839 = vmax.f32 %v817, 0.0
      %v840 = vmax.f32 %v822, 0.0
      %v841 = vmax.f32 %v825, 0.0
      %v842 = vpack.c.bf16 %v829, %v828
      %v843 = vpack.c.bf16 %v831, %v830
      %v844 = vpack.c.bf16 %v833, %v832
      %v845 = vpack.c.bf16 %v835, %v834
      %v846 = vpack.c.bf16 %v837, %v836
      %v847 = vpack.c.bf16 %v839, %v838
      %v848 = vpack.c.bf16 %v841, %v840
      %v849 = vld [vmem:[%s7] sm:$0xf]
      %v850 = vld [vmem:[%s7 + $0x4] sm:$0xf]
      %v851 = vld [vmem:[%s7 + $0x8] sm:$0xf]
      %v852 = vld [vmem:[%s7 + $0xc] sm:$0xf]
      %v853 = vld [vmem:[%s8] sm:$0x1]
      %v855 = vlaneseq
      %v856 = vshrl.u32 %v855, 7
      %v857 = vsub.s32 0, %v856
      %v858 = vrot.slane %v853, %v857
      %v864 = vunpack.c.l.b16 %v849
      %v865 = vunpack.c.l.b16 %v850
      %v866 = vunpack.c.l.b16 %v851
      %v867 = vunpack.c.l.b16 %v852
      %v868 = vpack.c.b16 %v865, %v864
      %v869 = vpack.c.b16 %v867, %v866
      %v873 = vsel %vm409, %v842, 0
      %v876 = vsel %vm409, %v843, 0
      %v879 = vsel %vm409, %v844, 0
      %v882 = vsel %vm409, %v845, 0
      %v885 = vsel %vm409, %v846, 0
      %v888 = vsel %vm409, %v847, 0
      %v891 = vsel %vm409, %v848, 0
      %893 = vmatprep.subr.bf16.mxu0 0
      %894 = vmatpush1.bf16.msra.mxu0 %v868
      %895 = vmatprep.subr.bf16.mxu0 0
      %896 = vmatpush1.bf16.msra.mxu0 %v869
      %897 = vmatprep.subr.bf16.mxu0 0
      %898 = vmatpush1.bf16.msra.mxu0 0
      %899 = vmatprep.subr.bf16.mxu0 0
      %900 = vmatpush1.bf16.msra.mxu0 0
      %901 = vmatprep.subr.bf16.mxu0 0
      %902 = vmatpush1.bf16.msra.mxu0 0
      %903 = vmatprep.subr.bf16.mxu0 0
      %904 = vmatpush1.bf16.msra.mxu0 0
      %905 = vmatprep.subr.bf16.mxu0 0
      %906 = vmatpush1.bf16.msra.mxu0 0
      %907 = vmatprep.subr.bf16.mxu0 0
      %908 = vmatpush1.bf16.msra.mxu0 0
      %909 = vmatprep.subr.bf16.mxu0 0
      %910 = vmatpush1.bf16.msra.mxu0 0
      %911 = vmatprep.subr.bf16.mxu0 0
      %912 = vmatpush1.bf16.msra.mxu0 0
      %913 = vmatprep.subr.bf16.mxu0 0
      %914 = vmatpush1.bf16.msra.mxu0 0
      %915 = vmatprep.subr.bf16.mxu0 0
      %916 = vmatpush1.bf16.msra.mxu0 0
      %917 = vmatprep.subr.bf16.mxu0 0
      %918 = vmatpush1.bf16.msra.mxu0 0
      %919 = vmatprep.subr.bf16.mxu0 0
      %920 = vmatpush1.bf16.msra.mxu0 0
      %921 = vmatprep.subr.bf16.mxu0 0
      %922 = vmatpush1.bf16.msra.mxu0 0
      %923 = vmatprep.subr.bf16.mxu0 0
      %924 = vmatpush1.bf16.msra.mxu0 0
      %925 = vmatprep.mubr.bf16.mxu0 0
      %926 = vmatmul.mubr.bf16.gmra.mrb[0].mxu0 %v873
      %v927 = vpop.f32.mrb[0].mxu0
      %v928 = vadd.f32 %v858, %v927
      %v929 = vpop.f32.mrb[0].mxu0
      %v930 = vpop.f32.mrb[0].mxu0
      %v931 = vadd.f32 %v858, %v930
      %v932 = vpop.f32.mrb[0].mxu0
      %933 = vmatprep.mubr.bf16.mxu0 0
      %934 = vmatmul.mubr.bf16.gmra.mrb[0].mxu0 %v876
      %v935 = vpop.f32.mrb[0].mxu0
      %v936 = vadd.f32 %v858, %v935
      %v937 = vpop.f32.mrb[0].mxu0
      %v938 = vpop.f32.mrb[0].mxu0
      %v939 = vadd.f32 %v858, %v938
      %v940 = vpop.f32.mrb[0].mxu0
      %941 = vmatprep.mubr.bf16.mxu0 0
      %942 = vmatmul.mubr.bf16.gmra.mrb[0].mxu0 %v879
      %v943 = vpop.f32.mrb[0].mxu0
      %v944 = vadd.f32 %v858, %v943
      %v945 = vpop.f32.mrb[0].mxu0
      %v946 = vpop.f32.mrb[0].mxu0
      %v947 = vadd.f32 %v858, %v946
      %v948 = vpop.f32.mrb[0].mxu0
      %949 = vmatprep.mubr.bf16.mxu0 0
      %950 = vmatmul.mubr.bf16.gmra.mrb[0].mxu0 %v882
      %v951 = vpop.f32.mrb[0].mxu0
      %v952 = vadd.f32 %v858, %v951
      %v953 = vpop.f32.mrb[0].mxu0
      %v954 = vpop.f32.mrb[0].mxu0
      %v955 = vadd.f32 %v858, %v954
      %v956 = vpop.f32.mrb[0].mxu0
      %957 = vmatprep.mubr.bf16.mxu0 0
      %958 = vmatmul.mubr.bf16.gmra.mrb[0].mxu0 %v885
      %v959 = vpop.f32.mrb[0].mxu0
      %v960 = vadd.f32 %v858, %v959
      %v961 = vpop.f32.mrb[0].mxu0
      %v962 = vpop.f32.mrb[0].mxu0
      %v963 = vadd.f32 %v858, %v962
      %v964 = vpop.f32.mrb[0].mxu0
      %965 = vmatprep.mubr.bf16.mxu0 0
      %966 = vmatmul.mubr.bf16.gmra.mrb[0].mxu0 %v888
      %v967 = vpop.f32.mrb[0].mxu0
      %v968 = vadd.f32 %v858, %v967
      %v969 = vpop.f32.mrb[0].mxu0
      %v970 = vpop.f32.mrb[0].mxu0
      %v971 = vadd.f32 %v858, %v970
      %v972 = vpop.f32.mrb[0].mxu0
      %973 = vmatprep.mubr.bf16.mxu0 0
      %974 = vmatmul.mubr.bf16.gmra.mrb[0].mxu0 %v891
      %v975 = vpop.f32.mrb[0].mxu0
      %v976 = vadd.f32 %v858, %v975
      %v977 = vpop.f32.mrb[0].mxu0
      %v978 = vpop.f32.mrb[0].mxu0
      %v979 = vadd.f32 %v858, %v978
      %v980 = vpop.f32.mrb[0].mxu0
      %981 = vdwg.mxu0
      %vm982 = vcmask 130048
      %983 = vst.msk [vmem:[%s334] sm:$0xff] %vm982, %v928
      %984 = vst.msk [vmem:[%s334 + $0x8] sm:$0xff] %vm982, %v931
      %985 = vst.msk [vmem:[%s334 + $0x10] sm:$0xff] %vm982, %v936
      %986 = vst.msk [vmem:[%s334 + $0x18] sm:$0xff] %vm982, %v939
      %987 = vst.msk [vmem:[%s334 + $0x20] sm:$0xff] %vm982, %v944
      %988 = vst.msk [vmem:[%s334 + $0x28] sm:$0xff] %vm982, %v947
      %989 = vst.msk [vmem:[%s334 + $0x30] sm:$0xff] %vm982, %v952
      %990 = vst.msk [vmem:[%s334 + $0x38] sm:$0xff] %vm982, %v955
      %991 = vst.msk [vmem:[%s334 + $0x40] sm:$0xff] %vm982, %v960
      %992 = vst.msk [vmem:[%s334 + $0x48] sm:$0xff] %vm982, %v963
      %993 = vst.msk [vmem:[%s334 + $0x50] sm:$0xff] %vm982, %v968
      %994 = vst.msk [vmem:[%s334 + $0x58] sm:$0xff] %vm982, %v971
      %995 = vst.msk [vmem:[%s334 + $0x60] sm:$0xff] %vm982, %v976
      %996 = vst.msk [vmem:[%s334 + $0x68] sm:$0xff] %vm982, %v979
      %s997 = smul.u32 14, %s20
      %p998 = scmp.lt.s32.totalorder %s997, 27
      %s999 = scalar_select %p998, %s997, 27
      %s1000 = smul.addr %s999, 8
      %s1001 = scalar_lea.vmem %s9, %s1000
      // Predicated region
      $region57: #{tpu_custom_call.1} parent=55 // pred_check
        %p1002 = pneg %p232
      $region58: #{tpu_custom_call.1} parent=55 // pred_check_branch
        %1004 = sbr.rel (%p1002) target = $region60
      $region59: #{tpu_custom_call.1} parent=55 // pred_region
        %s1005 = smul.u32 14, %s20
      $region60: #{tpu_custom_call.1} parent=55 // pred_fallthru
        _
    $region56: #{tpu_custom_call.1} parent=5 // pred_fallthru
      _
    %p1006 = scmp.le.s32.totalorder 2, %s15
    // Predicated region
    $region61: #{tpu_custom_call.1} parent=5 // pred_check
      %p1007 = pneg %p1006
    $region62: #{tpu_custom_call.1} parent=5 // pred_check_branch
      %1009 = sbr.rel (%p1007) target = $region64
    $region63: #{tpu_custom_call.1} parent=5 // pred_region
      %s1010 = ssub.s32 %s15, 2
      // Predicated region
      $region65: #{tpu_custom_call.1} parent=63 // pred_check
        %p1011 = pneg %p238
      $region66: #{tpu_custom_call.1} parent=63 // pred_check_branch
        %1013 = sbr.rel (%p1011) target = $region68
      $region67: #{tpu_custom_call.1} parent=63 // pred_region
        %s1014 = smul.u32 14, %s21
        %p1015 = scmp.lt.s32.totalorder %s1014, 27
        %s1016 = scalar_select %p1015, %s1014, 27
        %s1017 = smul.addr %s1016, 8
        %s1018 = scalar_lea.vmem %s9, %s1017
      $region68: #{tpu_custom_call.1} parent=63 // pred_fallthru
        _
    $region64: #{tpu_custom_call.1} parent=5 // pred_fallthru
      _
  $region6: #{tpu_custom_call.1} parent=0 // loop_footer
    %s19 = sadd.s32 1, %s15
  $region7: #{tpu_custom_call.1} parent=0 // loop_footer_branch
    %14 = sbr.rel target = $region3
  $region8: #{tpu_custom_call.1} parent=0 // loop_exit
    _

</llo_original>
